<compile_context>
chip_gen: v7x
topology: tpu7x:2x2x1
jax: 0.10.0
libtpu: 0.0.40
codegen_flags: <defaults>
</compile_context>

<pallas_src>
import functools

import jax
import jax.numpy as jnp
from jax import lax
from jax.experimental import pallas as pl
from jax.experimental.pallas import tpu as pltpu

LANES = 128
MAX_BLOCK_ROWS = 8192      # (8192, 128) f32 tile = 4 MiB per input per buffer
CHUNK_ROWS = 256           # in-kernel sub-tile: bounds vreg live ranges
NUM_PARALLEL = 2           # leading "parallel" grid axis (one slice per TC on v7x)
VMEM_LIMIT_BYTES = 40 * 1024 * 1024


def _round_up(a, b):
    return -(-a // b) * b


def _cdiv(a, b):
    return -(-a // b)


def _tversky_kernel(x_ref, t_ref, part_ref, *, block_rows, chunk_rows,
                    k_steps, rows, needs_mask):
    """Accumulates per-lane partials of sum(p*t), sum(p), sum(t).

    x_ref, t_ref : (block_rows, 128) VMEM tiles (original dtypes; upcast here)
    part_ref     : (1, 3, 8, 128) f32 VMEM output block; its index map is
                   independent of the reduction axis, so it stays resident in
                   VMEM and acts as the accumulator.
    """
    p_i = pl.program_id(0)   # parallel chunk
    k_i = pl.program_id(1)   # reduction step within the chunk
    blk = p_i * k_steps + k_i   # UNclamped logical block index (for masking)

    @pl.when(k_i == 0)
    def _():
        part_ref[...] = jnp.zeros_like(part_ref)

    n_chunks = block_rows // chunk_rows

    def make_chunk_body(masked):
        def chunk_body(c, carry):
            r0 = pl.multiple_of(c * chunk_rows, chunk_rows)
            p = jax.nn.sigmoid(x_ref[pl.ds(r0, chunk_rows), :].astype(jnp.float32))
            t = t_ref[pl.ds(r0, chunk_rows), :].astype(jnp.float32)
            if masked:
                # Global row of each element; zero out anything at/after the
                # valid row count.  jnp.where (not multiply) so NaN/Inf block
                # padding garbage can never poison the sums.
                row = (lax.broadcasted_iota(jnp.int32, p.shape, 0)
                       + blk * block_rows + c * chunk_rows)
                valid = row < rows
                p = jnp.where(valid, p, 0.0)
                t = jnp.where(valid, t, 0.0)
            # Reduce only across vregs (pure VPU adds); keep (8, 128) per-lane
            # partials so cross-lane reduction happens exactly once, outside.
            pr = p.reshape(chunk_rows // 8, 8, LANES)
            tr = t.reshape(chunk_rows // 8, 8, LANES)
            part_ref[0, 0] += jnp.sum(pr * tr, axis=0)   # partial sum(p * t)  (TP)
            part_ref[0, 1] += jnp.sum(pr, axis=0)        # partial sum(p)
            part_ref[0, 2] += jnp.sum(tr, axis=0)        # partial sum(t)
            return carry
        return chunk_body

    def run(masked):
        lax.fori_loop(0, n_chunks, make_chunk_body(masked), 0)

    if needs_mask:
        # Only edge / over-covered blocks pay for the masking ops.
        is_edge = (blk + 1) * block_rows > rows

        @pl.when(is_edge)
        def _():
            run(True)

        @pl.when(jnp.logical_not(is_edge))
        def _():
            run(False)
    else:
        run(False)


def tversky_loss(inputs, targets, smooth=1.0, alpha=0.5, beta=0.5):
    """Pallas equivalent of TverskyLoss.forward; returns a scalar f32."""
    x = inputs.reshape(-1)
    t = targets.reshape(-1)
    if t.dtype == jnp.bool_:
        # Stream binary masks at 1 byte/element; upcast to f32 inside VMEM.
        t = t.astype(jnp.int8)

    n = x.shape[0]
    rows = n // LANES            # full lane-dense rows handled by the kernel
    full = rows * LANES
    tail = n - full              # < 128 trailing elements handled in plain JAX

    tp = jnp.float32(0.0)
    sp = jnp.float32(0.0)
    st = jnp.float32(0.0)

    if rows > 0:
        if tail > 0:
            x2 = lax.slice(x, (0,), (full,)).reshape(rows, LANES)
            t2 = lax.slice(t, (0,), (full,)).reshape(rows, LANES)
        else:
            x2 = x.reshape(rows, LANES)
            t2 = t.reshape(rows, LANES)

        # Size blocks from ceil(rows / NUM_PARALLEL) so both TensorCores on
        # v7x get real work whenever the input is non-trivial.  block_rows is
        # always a multiple of 32 (covers f32/bf16/int8 native tilings) and,
        # above CHUNK_ROWS, a multiple of CHUNK_ROWS so chunks tile exactly.
        target_rows = _cdiv(rows, NUM_PARALLEL)
        if target_rows <= CHUNK_ROWS:
            block_rows = _round_up(target_rows, 32)
        else:
            block_rows = min(MAX_BLOCK_ROWS, _round_up(target_rows, CHUNK_ROWS))
        chunk_rows = min(CHUNK_ROWS, block_rows)

        num_blocks = _cdiv(rows, block_rows)
        n_par = min(NUM_PARALLEL, num_blocks)
        k_steps = _cdiv(num_blocks, n_par)

        needs_mask = (rows % block_rows != 0) or (n_par * k_steps != num_blocks)

        if n_par * k_steps == num_blocks:
            def in_index_map(p, k):
                return (p * k_steps + k, 0)
        else:
            # Grid over-covers by < n_par blocks; clamp so no block starts out
            # of bounds (the in-kernel mask zeroes the re-read data anyway,
            # since it uses the unclamped block index).
            def in_index_map(p, k):
                return (jnp.minimum(p * k_steps + k, num_blocks - 1), 0)

        kernel = functools.partial(
            _tversky_kernel,
            block_rows=block_rows, chunk_rows=chunk_rows,
            k_steps=k_steps, rows=rows, needs_mask=needs_mask)

        partials = pl.pallas_call(
            kernel,
            out_shape=jax.ShapeDtypeStruct((n_par, 3, 8, LANES), jnp.float32),
            grid_spec=pltpu.PrefetchScalarGridSpec(
                num_scalar_prefetch=0,
                grid=(n_par, k_steps),
                in_specs=[
                    pl.BlockSpec((block_rows, LANES), in_index_map),
                    pl.BlockSpec((block_rows, LANES), in_index_map),
                ],
                out_specs=pl.BlockSpec((1, 3, 8, LANES), lambda p, k: (p, 0, 0, 0)),
            ),
            compiler_params=pltpu.CompilerParams(
                dimension_semantics=("parallel", "arbitrary"),
                vmem_limit_bytes=VMEM_LIMIT_BYTES),
        )(x2, t2)

        # Tiny finalize in plain JAX (cross-lane / cross-core reduction).
        sums = jnp.sum(partials, axis=(0, 2, 3), dtype=jnp.float32)
        tp = sums[0]
        sp = sums[1]
        st = sums[2]

    if tail > 0:
        # Ragged < 128-element tail: trivial sigmoid + sums in plain JAX
        # (no full-tensor padding pass).
        xt = lax.slice(x, (full,), (n,)).astype(jnp.float32)
        tt = lax.slice(t, (full,), (n,)).astype(jnp.float32)
        pt = jax.nn.sigmoid(xt)
        tp = tp + jnp.sum(pt * tt)
        sp = sp + jnp.sum(pt)
        st = st + jnp.sum(tt)

    fp = sp - tp   # sum((1 - t) * p) = sum(p) - sum(p * t)
    fn = st - tp   # sum(t * (1 - p)) = sum(t) - sum(p * t)
    tversky = (tp + smooth) / (tp + alpha * fp + beta * fn + smooth)
    return (1.0 - tversky).astype(jnp.float32)


def _reference(inputs, targets, smooth=1.0, alpha=0.5, beta=0.5):
    p = jax.nn.sigmoid(inputs.astype(jnp.float32)).ravel()
    t = targets.astype(jnp.float32).ravel()
    tp = jnp.sum(p * t)
    fp = jnp.sum((1.0 - t) * p)
    fn = jnp.sum(t * (1.0 - p))
    return 1.0 - (tp + smooth) / (tp + alpha * fp + beta * fn + smooth)


if __name__ == "__main__":
    key = jax.random.PRNGKey(0)

    # 1) Small NCHW segmentation-style inputs (single masked edge block).
    k1, k2 = jax.random.split(key)
    B, C, H, W = 2, 4, 16, 16
    logits = jax.random.normal(k1, (B, C, H, W), dtype=jnp.float32)
    targets = (jax.random.uniform(k2, (B, C, H, W)) > 0.5).astype(jnp.float32)
    loss = jax.block_until_ready(tversky_loss(logits, targets))
    ref = _reference(logits, targets)
    assert jnp.allclose(loss, ref, atol=1e-5, rtol=1e-5), (loss, ref)

    # 2) Ragged shape (exercises the JAX tail path + gated in-kernel masking).
    k3, k4 = jax.random.split(k2)
    logits2 = jax.random.normal(k3, (2, 3, 15, 17), dtype=jnp.float32)
    targets2 = (jax.random.uniform(k4, (2, 3, 15, 17)) > 0.5).astype(jnp.float32)
    loss2 = jax.block_until_ready(
        tversky_loss(logits2, targets2, smooth=1.0, alpha=0.7, beta=0.3))
    ref2 = _reference(logits2, targets2, smooth=1.0, alpha=0.7, beta=0.3)
    assert jnp.allclose(loss2, ref2, atol=1e-5, rtol=1e-5), (loss2, ref2)

    # 3) bf16 logits (kernel streams bf16 and upcasts in VMEM; no wrapper cast).
    logits3 = logits.astype(jnp.bfloat16)
    loss3 = jax.block_until_ready(tversky_loss(logits3, targets))
    ref3 = _reference(logits3, targets)
    assert jnp.allclose(loss3, ref3, atol=1e-4, rtol=1e-4), (loss3, ref3)

    # 4) Boolean targets (streamed as int8, 1 byte/element).
    targets4 = jax.random.uniform(k4, (B, C, H, W)) > 0.5
    loss4 = jax.block_until_ready(tversky_loss(logits, targets4))
    ref4 = _reference(logits, targets4)
    assert jnp.allclose(loss4, ref4, atol=1e-5, rtol=1e-5), (loss4, ref4)

    # 5) Exactly-tiled multi-block input: 2 blocks, both cores, no masking path.
    k5, k6 = jax.random.split(k4)
    logits5 = jax.random.normal(k5, (2, 4, 64, 128), dtype=jnp.float32)
    targets5 = (jax.random.uniform(k6, (2, 4, 64, 128)) > 0.5).astype(jnp.float32)
    loss5 = jax.block_until_ready(tversky_loss(logits5, targets5))
    ref5 = _reference(logits5, targets5)
    assert jnp.allclose(loss5, ref5, atol=1e-5, rtol=1e-5), (loss5, ref5)

    print("KERNEL_OK")
</pallas_src>

<mosaic_0001>
module attributes {stable_mosaic.version = 11 : i64} {
  func.func @_tversky_kernel(%arg0: i32, %arg1: i32, %arg2: memref<32x128xf32, #tpu.memory_space<vmem>>, %arg3: memref<32x128xf32, #tpu.memory_space<vmem>>, %arg4: memref<1x3x8x128xf32, #tpu.memory_space<vmem>>) attributes {dimension_semantics = [#tpu.dimension_semantics<parallel>, #tpu.dimension_semantics<arbitrary>], iteration_bounds = array<i64: 1, 1>, scalar_prefetch = 0 : i64, scratch_operands = 0 : i64, tpu.core_type = #tpu.core_type<tc>, window_params = [{transform_indices = @transform_0, window_bounds = array<i64: 32, 128>}, {transform_indices = @transform_1, window_bounds = array<i64: 32, 128>}, {transform_indices = @transform_2, window_bounds = array<i64: 1, 3, 8, 128>}]} {
    %c1_i32 = arith.constant 1 : i32
    %0 = arith.muli %arg0, %c1_i32 : i32
    %1 = arith.addi %0, %arg1 : i32
    %c0_i32 = arith.constant 0 : i32
    %2 = arith.cmpi eq, %arg1, %c0_i32 : i32
    %3 = arith.extui %2 : i1 to i32
    %c0_i32_0 = arith.constant 0 : i32
    %4 = arith.cmpi ne, %3, %c0_i32_0 : i32
    scf.if %4 {
      %cst = arith.constant 0.000000e+00 : f32
      %13 = vector.broadcast %cst : f32 to vector<1x3x8x128xf32>
      %c0 = arith.constant 0 : index
      %c0_4 = arith.constant 0 : index
      %c0_5 = arith.constant 0 : index
      %c0_6 = arith.constant 0 : index
      %14 = vector.load %arg4[%c0, %c0_4, %c0_5, %c0_6] : memref<1x3x8x128xf32, #tpu.memory_space<vmem>>, vector<1x3x8x128xf32>
      tpu.vector_store %arg4[%c0, %c0_4, %c0_5, %c0_6], %13 {strides = array<i32>} : memref<1x3x8x128xf32, #tpu.memory_space<vmem>>, vector<1x3x8x128xf32>,
    } else {
    }
    %c1_i32_1 = arith.constant 1 : i32
    %5 = arith.addi %1, %c1_i32_1 : i32
    %c32_i32 = arith.constant 32 : i32
    %6 = arith.muli %5, %c32_i32 : i32
    %c16_i32 = arith.constant 16 : i32
    %7 = arith.cmpi sgt, %6, %c16_i32 : i32
    %8 = arith.extui %7 : i1 to i32
    %c0_i32_2 = arith.constant 0 : i32
    %9 = arith.cmpi ne, %8, %c0_i32_2 : i32
    scf.if %9 {
      %c0_i32_4 = arith.constant 0 : i32
      %c32_i32_5 = arith.constant 32 : i32
      %13 = arith.muli %c0_i32_4, %c32_i32_5 : i32
      %14 = tpu.assume_multiple %13, 32 : i32
      %15 = arith.index_cast %14 : i32 to index
      %c0 = arith.constant 0 : index
      %16 = vector.load %arg2[%15, %c0] : memref<32x128xf32, #tpu.memory_space<vmem>>, vector<32x128xf32>
      %17 = arith.negf %16 : vector<32x128xf32>
      %18 = math.exp %17 : vector<32x128xf32>
      %cst = arith.constant 1.000000e+00 : f32
      %19 = vector.broadcast %cst : f32 to vector<32x128xf32>
      %20 = arith.addf %19, %18 : vector<32x128xf32>
      %21 = arith.divf %19, %20 : vector<32x128xf32>
      %22 = arith.index_cast %14 : i32 to index
      %c0_6 = arith.constant 0 : index
      %23 = vector.load %arg3[%22, %c0_6] : memref<32x128xf32, #tpu.memory_space<vmem>>, vector<32x128xf32>
      %24 = tpu.iota {dimensions = array<i32: 0>} : vector<32x128xi32>
      %c32_i32_7 = arith.constant 32 : i32
      %25 = arith.muli %1, %c32_i32_7 : i32
      %26 = vector.broadcast %25 : i32 to vector<32x128xi32>
      %27 = arith.addi %24, %26 : vector<32x128xi32>
      %c32_i32_8 = arith.constant 32 : i32
      %28 = arith.muli %c0_i32_4, %c32_i32_8 : i32
      %29 = vector.broadcast %28 : i32 to vector<32x128xi32>
      %30 = arith.addi %27, %29 : vector<32x128xi32>
      %c16_i32_9 = arith.constant 16 : i32
      %31 = vector.broadcast %c16_i32_9 : i32 to vector<32x128xi32>
      %32 = arith.cmpi slt, %30, %31 : vector<32x128xi32>
      %cst_10 = arith.constant 0.000000e+00 : f32
      %33 = vector.broadcast %cst_10 : f32 to vector<32x128xf32>
      %34 = arith.select %32, %21, %33 : vector<32x128xi1>, vector<32x128xf32>
      %cst_11 = arith.constant 0.000000e+00 : f32
      %35 = vector.broadcast %cst_11 : f32 to vector<32x128xf32>
      %36 = arith.select %32, %23, %35 : vector<32x128xi1>, vector<32x128xf32>
      %37 = vector.shape_cast %34 : vector<32x128xf32> to vector<4x8x128xf32>
      %38 = vector.shape_cast %36 : vector<32x128xf32> to vector<4x8x128xf32>
      %c0_12 = arith.constant 0 : index
      %c0_13 = arith.constant 0 : index
      %c0_14 = arith.constant 0 : index
      %c0_15 = arith.constant 0 : index
      %39 = vector.load %arg4[%c0_12, %c0_13, %c0_14, %c0_15] : memref<1x3x8x128xf32, #tpu.memory_space<vmem>>, vector<1x1x8x128xf32>
      %40 = vector.shape_cast %39 : vector<1x1x8x128xf32> to vector<8x128xf32>
      %41 = arith.mulf %37, %38 : vector<4x8x128xf32>
      %cst_16 = arith.constant dense<0.000000e+00> : vector<8x128xf32>
      %42 = vector.multi_reduction <add>, %41, %cst_16 [0] : vector<4x8x128xf32> to vector<8x128xf32>
      %43 = arith.addf %40, %42 : vector<8x128xf32>
      %c0_17 = arith.constant 0 : index
      %c0_18 = arith.constant 0 : index
      %c0_19 = arith.constant 0 : index
      %c0_20 = arith.constant 0 : index
      %44 = vector.load %arg4[%c0_17, %c0_18, %c0_19, %c0_20] : memref<1x3x8x128xf32, #tpu.memory_space<vmem>>, vector<1x1x8x128xf32>
      %45 = vector.shape_cast %44 : vector<1x1x8x128xf32> to vector<8x128xf32>
      %46 = vector.shape_cast %43 : vector<8x128xf32> to vector<1x1x8x128xf32>
      tpu.vector_store %arg4[%c0_17, %c0_18, %c0_19, %c0_20], %46 {strides = array<i32>} : memref<1x3x8x128xf32, #tpu.memory_space<vmem>>, vector<1x1x8x128xf32>,
      %c0_21 = arith.constant 0 : index
      %c1 = arith.constant 1 : index
      %c0_22 = arith.constant 0 : index
      %c0_23 = arith.constant 0 : index
      %47 = vector.load %arg4[%c0_21, %c1, %c0_22, %c0_23] : memref<1x3x8x128xf32, #tpu.memory_space<vmem>>, vector<1x1x8x128xf32>
      %48 = vector.shape_cast %47 : vector<1x1x8x128xf32> to vector<8x128xf32>
      %cst_24 = arith.constant dense<0.000000e+00> : vector<8x128xf32>
      %49 = vector.multi_reduction <add>, %37, %cst_24 [0] : vector<4x8x128xf32> to vector<8x128xf32>
      %50 = arith.addf %48, %49 : vector<8x128xf32>
      %c0_25 = arith.constant 0 : index
      %c1_26 = arith.constant 1 : index
      %c0_27 = arith.constant 0 : index
      %c0_28 = arith.constant 0 : index
      %51 = vector.load %arg4[%c0_25, %c1_26, %c0_27, %c0_28] : memref<1x3x8x128xf32, #tpu.memory_space<vmem>>, vector<1x1x8x128xf32>
      %52 = vector.shape_cast %51 : vector<1x1x8x128xf32> to vector<8x128xf32>
      %53 = vector.shape_cast %50 : vector<8x128xf32> to vector<1x1x8x128xf32>
      tpu.vector_store %arg4[%c0_25, %c1_26, %c0_27, %c0_28], %53 {strides = array<i32>} : memref<1x3x8x128xf32, #tpu.memory_space<vmem>>, vector<1x1x8x128xf32>,
      %c0_29 = arith.constant 0 : index
      %c2 = arith.constant 2 : index
      %c0_30 = arith.constant 0 : index
      %c0_31 = arith.constant 0 : index
      %54 = vector.load %arg4[%c0_29, %c2, %c0_30, %c0_31] : memref<1x3x8x128xf32, #tpu.memory_space<vmem>>, vector<1x1x8x128xf32>
      %55 = vector.shape_cast %54 : vector<1x1x8x128xf32> to vector<8x128xf32>
      %cst_32 = arith.constant dense<0.000000e+00> : vector<8x128xf32>
      %56 = vector.multi_reduction <add>, %38, %cst_32 [0] : vector<4x8x128xf32> to vector<8x128xf32>
      %57 = arith.addf %55, %56 : vector<8x128xf32>
      %c0_33 = arith.constant 0 : index
      %c2_34 = arith.constant 2 : index
      %c0_35 = arith.constant 0 : index
      %c0_36 = arith.constant 0 : index
      %58 = vector.load %arg4[%c0_33, %c2_34, %c0_35, %c0_36] : memref<1x3x8x128xf32, #tpu.memory_space<vmem>>, vector<1x1x8x128xf32>
      %59 = vector.shape_cast %58 : vector<1x1x8x128xf32> to vector<8x128xf32>
      %60 = vector.shape_cast %57 : vector<8x128xf32> to vector<1x1x8x128xf32>
      tpu.vector_store %arg4[%c0_33, %c2_34, %c0_35, %c0_36], %60 {strides = array<i32>} : memref<1x3x8x128xf32, #tpu.memory_space<vmem>>, vector<1x1x8x128xf32>,
      %c1_i32_37 = arith.constant 1 : i32
    } else {
    }
    %true = arith.constant true
    %10 = arith.xori %7, %true : i1
    %11 = arith.extui %10 : i1 to i32
    %c0_i32_3 = arith.constant 0 : i32
    %12 = arith.cmpi ne, %11, %c0_i32_3 : i32
    scf.if %12 {
      %c0_i32_4 = arith.constant 0 : i32
      %c32_i32_5 = arith.constant 32 : i32
      %13 = arith.muli %c0_i32_4, %c32_i32_5 : i32
      %14 = tpu.assume_multiple %13, 32 : i32
      %15 = arith.index_cast %14 : i32 to index
      %c0 = arith.constant 0 : index
      %16 = vector.load %arg2[%15, %c0] : memref<32x128xf32, #tpu.memory_space<vmem>>, vector<32x128xf32>
      %17 = arith.negf %16 : vector<32x128xf32>
      %18 = math.exp %17 : vector<32x128xf32>
      %cst = arith.constant 1.000000e+00 : f32
      %19 = vector.broadcast %cst : f32 to vector<32x128xf32>
      %20 = arith.addf %19, %18 : vector<32x128xf32>
      %21 = arith.divf %19, %20 : vector<32x128xf32>
      %22 = arith.index_cast %14 : i32 to index
      %c0_6 = arith.constant 0 : index
      %23 = vector.load %arg3[%22, %c0_6] : memref<32x128xf32, #tpu.memory_space<vmem>>, vector<32x128xf32>
      %24 = vector.shape_cast %21 : vector<32x128xf32> to vector<4x8x128xf32>
      %25 = vector.shape_cast %23 : vector<32x128xf32> to vector<4x8x128xf32>
      %c0_7 = arith.constant 0 : index
      %c0_8 = arith.constant 0 : index
      %c0_9 = arith.constant 0 : index
      %c0_10 = arith.constant 0 : index
      %26 = vector.load %arg4[%c0_7, %c0_8, %c0_9, %c0_10] : memref<1x3x8x128xf32, #tpu.memory_space<vmem>>, vector<1x1x8x128xf32>
      %27 = vector.shape_cast %26 : vector<1x1x8x128xf32> to vector<8x128xf32>
      %28 = arith.mulf %24, %25 : vector<4x8x128xf32>
      %cst_11 = arith.constant dense<0.000000e+00> : vector<8x128xf32>
      %29 = vector.multi_reduction <add>, %28, %cst_11 [0] : vector<4x8x128xf32> to vector<8x128xf32>
      %30 = arith.addf %27, %29 : vector<8x128xf32>
      %c0_12 = arith.constant 0 : index
      %c0_13 = arith.constant 0 : index
      %c0_14 = arith.constant 0 : index
      %c0_15 = arith.constant 0 : index
      %31 = vector.load %arg4[%c0_12, %c0_13, %c0_14, %c0_15] : memref<1x3x8x128xf32, #tpu.memory_space<vmem>>, vector<1x1x8x128xf32>
      %32 = vector.shape_cast %31 : vector<1x1x8x128xf32> to vector<8x128xf32>
      %33 = vector.shape_cast %30 : vector<8x128xf32> to vector<1x1x8x128xf32>
      tpu.vector_store %arg4[%c0_12, %c0_13, %c0_14, %c0_15], %33 {strides = array<i32>} : memref<1x3x8x128xf32, #tpu.memory_space<vmem>>, vector<1x1x8x128xf32>,
      %c0_16 = arith.constant 0 : index
      %c1 = arith.constant 1 : index
      %c0_17 = arith.constant 0 : index
      %c0_18 = arith.constant 0 : index
      %34 = vector.load %arg4[%c0_16, %c1, %c0_17, %c0_18] : memref<1x3x8x128xf32, #tpu.memory_space<vmem>>, vector<1x1x8x128xf32>
      %35 = vector.shape_cast %34 : vector<1x1x8x128xf32> to vector<8x128xf32>
      %cst_19 = arith.constant dense<0.000000e+00> : vector<8x128xf32>
      %36 = vector.multi_reduction <add>, %24, %cst_19 [0] : vector<4x8x128xf32> to vector<8x128xf32>
      %37 = arith.addf %35, %36 : vector<8x128xf32>
      %c0_20 = arith.constant 0 : index
      %c1_21 = arith.constant 1 : index
      %c0_22 = arith.constant 0 : index
      %c0_23 = arith.constant 0 : index
      %38 = vector.load %arg4[%c0_20, %c1_21, %c0_22, %c0_23] : memref<1x3x8x128xf32, #tpu.memory_space<vmem>>, vector<1x1x8x128xf32>
      %39 = vector.shape_cast %38 : vector<1x1x8x128xf32> to vector<8x128xf32>
      %40 = vector.shape_cast %37 : vector<8x128xf32> to vector<1x1x8x128xf32>
      tpu.vector_store %arg4[%c0_20, %c1_21, %c0_22, %c0_23], %40 {strides = array<i32>} : memref<1x3x8x128xf32, #tpu.memory_space<vmem>>, vector<1x1x8x128xf32>,
      %c0_24 = arith.constant 0 : index
      %c2 = arith.constant 2 : index
      %c0_25 = arith.constant 0 : index
      %c0_26 = arith.constant 0 : index
      %41 = vector.load %arg4[%c0_24, %c2, %c0_25, %c0_26] : memref<1x3x8x128xf32, #tpu.memory_space<vmem>>, vector<1x1x8x128xf32>
      %42 = vector.shape_cast %41 : vector<1x1x8x128xf32> to vector<8x128xf32>
      %cst_27 = arith.constant dense<0.000000e+00> : vector<8x128xf32>
      %43 = vector.multi_reduction <add>, %25, %cst_27 [0] : vector<4x8x128xf32> to vector<8x128xf32>
      %44 = arith.addf %42, %43 : vector<8x128xf32>
      %c0_28 = arith.constant 0 : index
      %c2_29 = arith.constant 2 : index
      %c0_30 = arith.constant 0 : index
      %c0_31 = arith.constant 0 : index
      %45 = vector.load %arg4[%c0_28, %c2_29, %c0_30, %c0_31] : memref<1x3x8x128xf32, #tpu.memory_space<vmem>>, vector<1x1x8x128xf32>
      %46 = vector.shape_cast %45 : vector<1x1x8x128xf32> to vector<8x128xf32>
      %47 = vector.shape_cast %44 : vector<8x128xf32> to vector<1x1x8x128xf32>
      tpu.vector_store %arg4[%c0_28, %c2_29, %c0_30, %c0_31], %47 {strides = array<i32>} : memref<1x3x8x128xf32, #tpu.memory_space<vmem>>, vector<1x1x8x128xf32>,
      %c1_i32_32 = arith.constant 1 : i32
    } else {
    }
    return
  }
  func.func @transform_0(%arg0: i32, %arg1: i32) -> (i32, i32) {
    %c1_i32 = arith.constant 1 : i32
    %0 = arith.muli %arg0, %c1_i32 : i32
    %1 = arith.addi %0, %arg1 : i32
    %c0_i32 = arith.constant 0 : i32
    %c0_i32_0 = arith.constant 0 : i32
    return %1, %c0_i32 : i32, i32
  }
  func.func @transform_1(%arg0: i32, %arg1: i32) -> (i32, i32) {
    %c1_i32 = arith.constant 1 : i32
    %0 = arith.muli %arg0, %c1_i32 : i32
    %1 = arith.addi %0, %arg1 : i32
    %c0_i32 = arith.constant 0 : i32
    %c0_i32_0 = arith.constant 0 : i32
    return %1, %c0_i32 : i32, i32
  }
  func.func @transform_2(%arg0: i32, %arg1: i32) -> (i32, i32, i32, i32) {
    %c0_i32 = arith.constant 0 : i32
    %c0_i32_0 = arith.constant 0 : i32
    %c0_i32_1 = arith.constant 0 : i32
    %c0_i32_2 = arith.constant 0 : i32
    return %arg0, %c0_i32, %c0_i32_0, %c0_i32_1 : i32, i32, i32, i32
  }
}

</mosaic_0001>

<llo_original>
// kernel: tpu_custom_call.1
$region0: #{tpu_custom_call.1}
  #allocation0 [shape = 'u32[]', space=smem, size = 0x4, offset = 0x4, fixed_abs, tag = 'smem constant byte address 0x4 - core index']
  #allocation1 [shape = 'u32[144,128]{1,0:T(1,128)}', space=vmem, size = 0x12000, scoped, tag = 'internal scratch']
  %s0 = inlined_call_operand.hbm [shape: f32[16,128], index: 0, kind: input, shape index: {}]
  %s1 = inlined_call_operand.hbm [shape: f32[16,128], index: 1, kind: input, shape index: {}]
  %s2 = inlined_call_operand.hbm [shape: f32[1,3,8,128], index: 2, kind: output, shape index: {}]
  %s3 = sld [smem:[#allocation0]]
  $region38: #{tpu_custom_call.1} parent=0
    _
  %s5 = ssub.s32 1, %s3
  %s6 = scalar_select 0, %s5, %s3
  $region1: #{tpu_custom_call.1} parent=0
    #allocation2 [shape = 'u8[16384]{0}', space=vmem, size = 0x4000, scoped, tag = 'input window, operand 0, single buffered']
    #allocation3 [shape = 's32[1]{0}', space=sflag, size = 0x4, scoped, tag = 'scoped memory for tpu_custom_call.1']
    #allocation4 [shape = 's32[1]{0}', space=sflag, size = 0x4, scoped, tag = 'scoped memory for tpu_custom_call.1']
    #allocation5 [shape = 'u8[16384]{0}', space=vmem, size = 0x4000, scoped, tag = 'input window, operand 1, single buffered']
    #allocation6 [shape = 's32[1]{0}', space=sflag, size = 0x4, scoped, tag = 'scoped memory for tpu_custom_call.1']
    #allocation7 [shape = 'u8[12288]{0}', space=vmem, size = 0x3000, scoped, tag = 'output window, operand 0, single buffered']
    %7 = vsyncpa [#allocation3], 0
    %8 = vsyncpa [#allocation6], 0
    %9 = vsyncpa [#allocation4], 0
    // Predicated region
    $region2: #{tpu_custom_call.1} parent=1 // pred_check
      _
    $region3: #{tpu_custom_call.1} parent=1 // pred_check_branch
      %11 = sbr.rel (0) target = $region5
    $region4: #{tpu_custom_call.1} parent=1 // pred_region
      %s12 = sadd.s32 0, 0
      %s13 = smul.u32 4, %s12
      %s14 = ssub.s32 2, %s13
      %s15 = smul.u32 128, %s14
      %s17 = ssub.s32 512, %s15
      %18 = vsyncadd [#allocation3], %s17
      %p19 = scmp.ne.s32.totalorder 0, %s15
      %s20 = smul.addr %s13, 128
      %s21 = scalar_lea.hbm %s0, %s20
      %s22 = smul.u32 8, %s14
      %s23 = sshll.u32 [#allocation2], 4
      %s24 = int_to_ptr.vmem [resolvable:$true] %s23
      %s25 = sshll.u32 %s22, 4
      %29 = dma.hbm_to_vmem [thread:$0]  (%p19), %s21, %s25, %s24, [#allocation3], 128, 128, 8
    $region5: #{tpu_custom_call.1} parent=1 // pred_fallthru
      _
    // Predicated region
    $region6: #{tpu_custom_call.1} parent=1 // pred_check
      _
    $region7: #{tpu_custom_call.1} parent=1 // pred_check_branch
      %31 = sbr.rel (0) target = $region9
    $region8: #{tpu_custom_call.1} parent=1 // pred_region
      %s32 = sadd.s32 0, 0
      %s33 = smul.u32 4, %s32
      %s34 = ssub.s32 2, %s33
      %s35 = smul.u32 128, %s34
      %s37 = ssub.s32 512, %s35
      %38 = vsyncadd [#allocation6], %s37
      %p39 = scmp.ne.s32.totalorder 0, %s35
      %s40 = smul.addr %s33, 128
      %s41 = scalar_lea.hbm %s1, %s40
      %s42 = smul.u32 8, %s34
      %s43 = sshll.u32 [#allocation5], 4
      %s44 = int_to_ptr.vmem [resolvable:$true] %s43
      %s45 = sshll.u32 %s42, 4
      %49 = dma.hbm_to_vmem [thread:$0]  (%p39), %s41, %s45, %s44, [#allocation6], 128, 128, 8
    $region9: #{tpu_custom_call.1} parent=1 // pred_fallthru
      _
    // Predicated region
    $region10: #{tpu_custom_call.1} parent=1 // pred_check
      _
    $region11: #{tpu_custom_call.1} parent=1 // pred_check_branch
      %51 = sbr.rel (0) target = $region13
    $region12: #{tpu_custom_call.1} parent=1 // pred_region
      %52 = dma.done [#allocation3], 512
    $region13: #{tpu_custom_call.1} parent=1 // pred_fallthru
      _
    // Predicated region
    $region14: #{tpu_custom_call.1} parent=1 // pred_check
      _
    $region15: #{tpu_custom_call.1} parent=1 // pred_check_branch
      %54 = sbr.rel (0) target = $region17
    $region16: #{tpu_custom_call.1} parent=1 // pred_region
      %55 = dma.done [#allocation6], 512
    $region17: #{tpu_custom_call.1} parent=1 // pred_fallthru
      _
    %s56 = sadd.s32 0, 0
    %s57 = smul.u32 4, %s56
    %s58 = ssub.s32 2, %s57
    %s59 = smul.u32 128, %s58
    %s60 = sadd.s32 0, 0
    %s61 = smul.u32 4, %s60
    %s62 = ssub.s32 2, %s61
    %s63 = smul.u32 128, %s62
    %s64 = sadd.s32 0, 0
    %p65 = scmp.eq.s32.totalorder 0, 0
    // Predicated region
    $region18: #{tpu_custom_call.1} parent=1 // pred_check
      %p66 = pneg %p65
    $region19: #{tpu_custom_call.1} parent=1 // pred_check_branch
      %68 = sbr.rel (%p66) target = $region21
    $region20: #{tpu_custom_call.1} parent=1 // pred_region
      %69 = vst [vmem:[#allocation7] sm:$0xff] 0.0
      %70 = vst [vmem:[#allocation7 + $0x8] sm:$0xff] 0.0
      %71 = vst [vmem:[#allocation7 + $0x10] sm:$0xff] 0.0
    $region21: #{tpu_custom_call.1} parent=1 // pred_fallthru
      _
    %s72 = sadd.s32 %s64, 1
    %s73 = smul.u32 %s72, 32
    %p74 = scmp.gt.s32.totalorder %s73, 16
    // Predicated region
    $region22: #{tpu_custom_call.1} parent=1 // pred_check
      %p75 = pneg %p74
    $region23: #{tpu_custom_call.1} parent=1 // pred_check_branch
      %77 = sbr.rel (%p75) target = $region25
    $region24: #{tpu_custom_call.1} parent=1 // pred_region
      %v78 = vld [vmem:[#allocation2] sm:$0xff]
      %v79 = vld [vmem:[#allocation2 + $0x8] sm:$0xff]
      %v80 = vld [vmem:[#allocation2 + $0x10] sm:$0xff]
      %v81 = vld [vmem:[#allocation2 + $0x18] sm:$0xff]
      %v82 = vxor.u32 %v78, 2147483648
      %v83 = vxor.u32 %v79, 2147483648
      %v84 = vxor.u32 %v80, 2147483648
      %v85 = vxor.u32 %v81, 2147483648
      %v86 = vmul.f32 %v82, 1.442695
      %v87 = vpow.pop %v86
      %v88 = vmul.f32 %v83, 1.442695
      %v89 = vpow.pop %v88
      %v90 = vmul.f32 %v84, 1.442695
      %v91 = vpow.pop %v90
      %v92 = vmul.f32 %v85, 1.442695
      %v93 = vpow.pop %v92
      %v94 = vadd.f32 %v87, 1.0
      %v95 = vadd.f32 %v89, 1.0
      %v96 = vadd.f32 %v91, 1.0
      %v97 = vadd.f32 %v93, 1.0
      %v98 = vrcp.pop %v94
      %v99 = vmul.f32 1.0, %v98
      %v100 = vrcp.pop %v95
      %v101 = vmul.f32 1.0, %v100
      %v102 = vrcp.pop %v96
      %v103 = vmul.f32 1.0, %v102
      %v104 = vrcp.pop %v97
      %v105 = vmul.f32 1.0, %v104
      %v106 = vld [vmem:[#allocation5] sm:$0xff]
      %v107 = vld [vmem:[#allocation5 + $0x8] sm:$0xff]
      %v108 = vld [vmem:[#allocation5 + $0x10] sm:$0xff]
      %v109 = vld [vmem:[#allocation5 + $0x18] sm:$0xff]
      %v110 = vlaneseq
      %v111 = vshrl.u32 %v110, 7
      %v112 = vadd.s32 %v111, 8
      %v113 = vadd.s32 %v111, 16
      %v114 = vadd.s32 %v111, 24
      %s115 = smul.u32 %s64, 32
      %v116 = vstv %s115
      %v117 = vadd.s32 %v111, %v116
      %v118 = vadd.s32 %v112, %v116
      %v119 = vadd.s32 %v113, %v116
      %v120 = vadd.s32 %v114, %v116
      %vm121 = vcmp.lt.s32.totalorder %v117, 16
      %vm122 = vcmp.lt.s32.totalorder %v118, 16
      %vm123 = vcmp.lt.s32.totalorder %v119, 16
      %vm124 = vcmp.lt.s32.totalorder %v120, 16
      %v125 = vsel %vm121, %v99, 0.0
      %v126 = vsel %vm122, %v101, 0.0
      %v127 = vsel %vm123, %v103, 0.0
      %v128 = vsel %vm124, %v105, 0.0
      %v129 = vsel %vm121, %v106, 0.0
      %v130 = vsel %vm122, %v107, 0.0
      %v131 = vsel %vm123, %v108, 0.0
      %v132 = vsel %vm124, %v109, 0.0
      %v133 = vld [vmem:[#allocation7] sm:$0xff]
      %v134 = vmul.f32 %v125, %v129
      %v135 = vmul.f32 %v126, %v130
      %v136 = vmul.f32 %v127, %v131
      %v137 = vmul.f32 %v128, %v132
      %v138 = vadd.f32 %v134, %v135
      %v139 = vadd.f32 %v138, %v136
      %v140 = vadd.f32 %v139, %v137
      %v141 = vadd.f32 %v133, %v140
      %142 = vst [vmem:[#allocation7] sm:$0xff] %v141
      %s143 = scalar_lea.vmem [#allocation7], 8
      %v144 = vld [vmem:[%s143] sm:$0xff]
      %v145 = vadd.f32 %v125, %v126
      %v146 = vadd.f32 %v145, %v127
      %v147 = vadd.f32 %v146, %v128
      %v148 = vadd.f32 %v144, %v147
      %149 = vst [vmem:[%s143] sm:$0xff] %v148
      %s150 = scalar_lea.vmem [#allocation7], 16
      %v151 = vld [vmem:[%s150] sm:$0xff]
      %v152 = vadd.f32 %v129, %v130
      %v153 = vadd.f32 %v152, %v131
      %v154 = vadd.f32 %v153, %v132
      %v155 = vadd.f32 %v151, %v154
      %156 = vst [vmem:[%s150] sm:$0xff] %v155
    $region25: #{tpu_custom_call.1} parent=1 // pred_fallthru
      _
    %p157 = scmp.le.s32.totalorder %s73, 16
    // Predicated region
    $region26: #{tpu_custom_call.1} parent=1 // pred_check
      %p158 = pneg %p157
    $region27: #{tpu_custom_call.1} parent=1 // pred_check_branch
      %160 = sbr.rel (%p158) target = $region29
    $region28: #{tpu_custom_call.1} parent=1 // pred_region
      %v161 = vld [vmem:[#allocation2] sm:$0xff]
      %v162 = vld [vmem:[#allocation2 + $0x8] sm:$0xff]
      %v163 = vld [vmem:[#allocation2 + $0x10] sm:$0xff]
      %v164 = vld [vmem:[#allocation2 + $0x18] sm:$0xff]
      %v165 = vxor.u32 %v161, 2147483648
      %v166 = vxor.u32 %v162, 2147483648
      %v167 = vxor.u32 %v163, 2147483648
      %v168 = vxor.u32 %v164, 2147483648
      %v169 = vmul.f32 %v165, 1.442695
      %v170 = vpow.pop %v169
      %v171 = vmul.f32 %v166, 1.442695
      %v172 = vpow.pop %v171
      %v173 = vmul.f32 %v167, 1.442695
      %v174 = vpow.pop %v173
      %v175 = vmul.f32 %v168, 1.442695
      %v176 = vpow.pop %v175
      %v177 = vadd.f32 %v170, 1.0
      %v178 = vadd.f32 %v172, 1.0
      %v179 = vadd.f32 %v174, 1.0
      %v180 = vadd.f32 %v176, 1.0
      %v181 = vrcp.pop %v177
      %v182 = vmul.f32 1.0, %v181
      %v183 = vrcp.pop %v178
      %v184 = vmul.f32 1.0, %v183
      %v185 = vrcp.pop %v179
      %v186 = vmul.f32 1.0, %v185
      %v187 = vrcp.pop %v180
      %v188 = vmul.f32 1.0, %v187
      %v189 = vld [vmem:[#allocation5] sm:$0xff]
      %v190 = vld [vmem:[#allocation5 + $0x8] sm:$0xff]
      %v191 = vld [vmem:[#allocation5 + $0x10] sm:$0xff]
      %v192 = vld [vmem:[#allocation5 + $0x18] sm:$0xff]
      %v193 = vld [vmem:[#allocation7] sm:$0xff]
      %v194 = vmul.f32 %v182, %v189
      %v195 = vmul.f32 %v184, %v190
      %v196 = vmul.f32 %v186, %v191
      %v197 = vmul.f32 %v188, %v192
      %v198 = vadd.f32 %v194, %v195
      %v199 = vadd.f32 %v198, %v196
      %v200 = vadd.f32 %v199, %v197
      %v201 = vadd.f32 %v193, %v200
      %202 = vst [vmem:[#allocation7] sm:$0xff] %v201
      %s203 = scalar_lea.vmem [#allocation7], 8
      %v204 = vld [vmem:[%s203] sm:$0xff]
      %v205 = vadd.f32 %v182, %v184
      %v206 = vadd.f32 %v205, %v186
      %v207 = vadd.f32 %v206, %v188
      %v208 = vadd.f32 %v204, %v207
      %209 = vst [vmem:[%s203] sm:$0xff] %v208
      %s210 = scalar_lea.vmem [#allocation7], 16
      %v211 = vld [vmem:[%s210] sm:$0xff]
      %v212 = vadd.f32 %v189, %v190
      %v213 = vadd.f32 %v212, %v191
      %v214 = vadd.f32 %v213, %v192
      %v215 = vadd.f32 %v211, %v214
      %216 = vst [vmem:[%s210] sm:$0xff] %v215
    $region29: #{tpu_custom_call.1} parent=1 // pred_fallthru
      _
    // Predicated region
    $region30: #{tpu_custom_call.1} parent=1 // pred_check
      _
    $region31: #{tpu_custom_call.1} parent=1 // pred_check_branch
      %218 = sbr.rel (0) target = $region33
    $region32: #{tpu_custom_call.1} parent=1 // pred_region
      %s220 = ssub.s32 384, 384
      %221 = vsyncadd [#allocation4], %s220
      %s222 = sshll.u32 [#allocation7], 4
      %s223 = int_to_ptr.vmem [resolvable:$true] %s222
      %228 = dma.vmem_to_hbm [thread:$0]  %s223, 384, %s2, [#allocation4], 128, 128, 8
    $region33: #{tpu_custom_call.1} parent=1 // pred_fallthru
      _
    // Predicated region
    $region34: #{tpu_custom_call.1} parent=1 // pred_check
      _
    $region35: #{tpu_custom_call.1} parent=1 // pred_check_branch
      %230 = sbr.rel (0) target = $region37
    $region36: #{tpu_custom_call.1} parent=1 // pred_region
      %231 = dma.done [#allocation4], 384
    $region37: #{tpu_custom_call.1} parent=1 // pred_fallthru
      _
    %232 = vsyncpa [#allocation3], 1
    %233 = vsyncpa [#allocation6], 1
    %234 = vsyncpa [#allocation4], 1

</llo_original>
